<compile_context>
chip_gen: v5e
topology: v5e:2x2
jax: 0.10.0
libtpu: 0.0.40
codegen_flags: <defaults>
</compile_context>

<pallas_src>
import math

import jax
import jax.numpy as jnp
import numpy as np
from jax.experimental import pallas as pl
from jax.experimental.pallas import tpu as pltpu


def _largest_divisor_leq(n, cap):
    cap = int(max(1, min(n, cap)))
    for d in range(cap, 0, -1):
        if n % d == 0:
            return d
    return 1


# ---------------------------------------------------------------------------
# Fused linear (x @ W + b) Pallas GEMM, M-tiled, lane-dense output.
# ---------------------------------------------------------------------------
def _linear_kernel(x_ref, w_ref, b_ref, o_ref):
    acc = jnp.dot(x_ref[...], w_ref[...], preferred_element_type=jnp.float32)
    o_ref[...] = (acc + b_ref[...]).astype(o_ref.dtype)


def _pallas_linear(x, w, b, *, out_dtype=None):
    """x: (M, K); w: (K, N); b: (N,)  ->  (M, N).

    Rows of *all* batch elements are processed together (M tile up to 256), so the
    MXU sees >=128 rows per issue at realistic sizes.  N is padded to a multiple of
    128 when needed so every output store is a full-lane (unmasked) vst; the pad is
    sliced off in the wrapper.  K is kept fully resident (fine for n_feat up to ~1K).
    """
    M, K = x.shape
    K2, N = w.shape
    assert K == K2
    out_dtype = out_dtype or x.dtype

    n_pad = max(128, ((N + 127) // 128) * 128)
    if n_pad != N:
        w = jnp.pad(w, ((0, 0), (0, n_pad - N)))
        b = jnp.pad(b, (0, n_pad - N))
    b2 = b.reshape(1, n_pad).astype(jnp.float32)

    tm = _largest_divisor_leq(M, 256)
    grid = (M // tm,)

    out = pl.pallas_call(
        _linear_kernel,
        out_shape=jax.ShapeDtypeStruct((M, n_pad), out_dtype),
        grid_spec=pltpu.PrefetchScalarGridSpec(
            num_scalar_prefetch=0,
            grid=grid,
            in_specs=[
                pl.BlockSpec((tm, K), lambda i: (i, 0)),        # activations (M-tiled)
                pl.BlockSpec((K, n_pad), lambda i: (0, 0)),     # weight (grid-invariant)
                pl.BlockSpec((1, n_pad), lambda i: (0, 0)),     # bias   (grid-invariant)
            ],
            out_specs=pl.BlockSpec((tm, n_pad), lambda i: (i, 0)),
        ),
        compiler_params=pltpu.CompilerParams(
            dimension_semantics=("parallel",),
            vmem_limit_bytes=32 * 1024 * 1024,
        ),
    )(x, w, b2)

    if n_pad != N:
        out = out[:, :N]
    return out


# ---------------------------------------------------------------------------
# Masked softmax + attn.V core.
# ---------------------------------------------------------------------------
def _synth_attn_kernel(mask_ref, wattn_ref, v_ref, x_ref):
    """mask_ref : (Bblk, T1blk, T2) int8   (nonzero = keep, 0 = masked out)
       wattn_ref: (H, T1blk, T2)           random synthesizer logits (batch-invariant)
       v_ref    : (Bblk, H, T2, d_k)       per-head projected values
       x_ref    : (Bblk, H, T1blk, d_k)
    """
    bblk, h, t2, d_k = v_ref.shape
    t1blk = wattn_ref.shape[1]

    # Mask predicate: computed once, broadcast once, reused for both where()s.
    masked = mask_ref[...] == 0                                          # (Bblk, T1blk, T2)
    maskb = jnp.broadcast_to(masked[:, None, :, :], (bblk, h, t1blk, t2))

    logits = jnp.broadcast_to(wattn_ref[...][None].astype(jnp.float32),
                              (bblk, h, t1blk, t2))
    neg = jnp.finfo(jnp.float32).min
    logits = jnp.where(maskb, neg, logits)

    # softmax over time2 (lane axis)
    mx = jnp.max(logits, axis=-1, keepdims=True)
    ex = jnp.exp(logits - mx)
    denom = jnp.sum(ex, axis=-1, keepdims=True)
    attn = ex * pl.reciprocal(denom, approx=True)                        # EUP vrcp
    attn = jnp.where(maskb, 0.0, attn)
    # TODO(synk): dropout on attn is identity here (eval-mode / deterministic kernel).

    # One batched matmul over the folded (batch*head) axis - no per-head loop/concat.
    attn2 = attn.reshape(bblk * h, t1blk, t2)
    v2 = v_ref[...].astype(jnp.float32).reshape(bblk * h, t2, d_k)
    x = jnp.einsum("bts,bsd->btd", attn2, v2,
                   preferred_element_type=jnp.float32)                   # (Bblk*H, T1blk, d_k)
    x_ref[...] = x.reshape(bblk, h, t1blk, d_k).astype(x_ref.dtype)


def _pallas_synth_attention(mask_i8, wattn, v_heads):
    """mask_i8: (B, T1, T2) int8; wattn: (H, T1, T2); v_heads: (B, H, T2, d_k)."""
    B, T1, T2 = mask_i8.shape
    H = wattn.shape[0]
    d_k = v_heads.shape[-1]

    # Query tile: up to 128 query rows per step (keeps the (H,T1blk,T2) f32
    # intermediates bounded on 64 MiB-VMEM parts when T1/T2/H grow).
    t1_blk = _largest_divisor_leq(T1, 128)
    # Batch block: fold batch elements to amortize the ~0.35us/step overhead, but keep
    # >=2 grid steps when B > 1 so megacore ("parallel") sharding has work for 2 cores.
    b_target = max(1, 256 // max(1, H * t1_blk))
    if B > 1:
        b_target = min(b_target, B // 2)
    b_blk = _largest_divisor_leq(B, b_target)

    grid = (B // b_blk, T1 // t1_blk)

    return pl.pallas_call(
        _synth_attn_kernel,
        out_shape=jax.ShapeDtypeStruct((B, H, T1, d_k), v_heads.dtype),
        grid_spec=pltpu.PrefetchScalarGridSpec(
            num_scalar_prefetch=0,
            grid=grid,
            in_specs=[
                pl.BlockSpec((b_blk, t1_blk, T2), lambda b, q: (b, q, 0)),   # mask
                pl.BlockSpec((H, t1_blk, T2), lambda b, q: (0, q, 0)),       # synth logits
                pl.BlockSpec((b_blk, H, T2, d_k), lambda b, q: (b, 0, 0, 0)),  # values
            ],
            out_specs=pl.BlockSpec((b_blk, H, t1_blk, d_k),
                                   lambda b, q: (b, 0, q, 0)),
        ),
        compiler_params=pltpu.CompilerParams(
            # batch blocks and query tiles write disjoint output blocks -> both parallel
            dimension_semantics=("parallel", "parallel"),
            vmem_limit_bytes=32 * 1024 * 1024,
        ),
    )(mask_i8, wattn, v_heads)


# ---------------------------------------------------------------------------
# Full module forward.
# ---------------------------------------------------------------------------
def random_synthesizer_attention(value, mask, attention_weight, wv, bv, wo, bo,
                                 *, n_head, time1, time2):
    """value: (B, T2, F); mask: (B, T1, T2) (nonzero = keep); attention_weight: (H*T1, T2);
    wv, wo: (F, F) torch-style (out, in) weights; bv, bo: (F,)."""
    B, T2, F = value.shape
    assert T2 == time2
    assert F % n_head == 0
    d_k = F // n_head

    # linear_v over ALL batch*time2 rows at once (torch Linear does x @ W.T + b).
    vproj = _pallas_linear(value.reshape(B * T2, F), wv.T, bv, out_dtype=value.dtype)

    # Head split: layout plumbing done in the wrapper (free), not in the kernel.
    v_heads = vproj.reshape(B, T2, n_head, d_k).transpose(0, 2, 1, 3)    # (B, H, T2, d_k)

    wattn = attention_weight.reshape(n_head, time1, time2)
    mask_i8 = (mask != 0).astype(jnp.int8)                               # 4x less mask DMA

    # Masked softmax + attention-weighted values (Pallas core).
    x_heads = _pallas_synth_attention(mask_i8, wattn, v_heads)           # (B, H, T1, d_k)

    # Head merge (wrapper layout plumbing) + linear_out over all batch*time1 rows.
    x = x_heads.transpose(0, 2, 1, 3).reshape(B * time1, F)
    out = _pallas_linear(x, wo.T, bo, out_dtype=value.dtype)
    return out.reshape(B, time1, F)


def _reference(value, mask, attention_weight, wv, bv, wo, bo, *, n_head, time1, time2):
    """Pure-JAX reference matching the PyTorch forward (dropout = identity)."""
    B, T2, F = value.shape
    d_k = F // n_head
    v = value @ wv.T + bv                                                # (B, T2, F)
    v = v.reshape(B, T2, n_head, d_k).transpose(0, 2, 1, 3)              # (B, H, T2, d_k)
    attn = attention_weight.reshape(1, n_head, time1, time2)
    attn = jnp.broadcast_to(attn, (B, n_head, time1, time2))
    m = (mask[:, None, :, :] == 0)
    min_value = jnp.finfo(jnp.float32).min
    attn = jnp.where(m, min_value, attn)
    attn = jax.nn.softmax(attn, axis=-1)
    attn = jnp.where(m, 0.0, attn)
    x = jnp.einsum('bhts,bhsd->bhtd', attn, v)                           # (B, H, T1, d_k)
    x = x.transpose(0, 2, 1, 3).reshape(B, time1, F)
    return x @ wo.T + bo


if __name__ == "__main__":
    # Small shapes consistent with the module.
    n_head = 2
    n_feat = 32
    time1 = 8
    time2 = 8
    batch = 2

    key = jax.random.PRNGKey(0)
    k_v, k_m, k_attn, k_wv, k_bv, k_wo, k_bo = jax.random.split(key, 7)

    value = jax.random.normal(k_v, (batch, time2, n_feat), dtype=jnp.float32)
    # mask: (batch, time1, time2), 1 = keep, 0 = masked; keep at least one per row.
    mask = (jax.random.uniform(k_m, (batch, time1, time2)) > 0.2).astype(jnp.int32)
    mask = mask.at[:, :, 0].set(1)

    # Parameters with PyTorch-style init ranges.
    b_attn = 1.0 / math.sqrt(time2)
    attention_weight = jax.random.uniform(
        k_attn, (n_head * time1, time2), minval=-b_attn, maxval=b_attn, dtype=jnp.float32)
    b_lin = 1.0 / math.sqrt(n_feat)
    wv = jax.random.uniform(k_wv, (n_feat, n_feat), minval=-b_lin, maxval=b_lin, dtype=jnp.float32)
    bv = jax.random.uniform(k_bv, (n_feat,), minval=-b_lin, maxval=b_lin, dtype=jnp.float32)
    wo = jax.random.uniform(k_wo, (n_feat, n_feat), minval=-b_lin, maxval=b_lin, dtype=jnp.float32)
    bo = jax.random.uniform(k_bo, (n_feat,), minval=-b_lin, maxval=b_lin, dtype=jnp.float32)

    out = random_synthesizer_attention(
        value, mask, attention_weight, wv, bv, wo, bo,
        n_head=n_head, time1=time1, time2=time2)
    out = jax.block_until_ready(out)

    ref = _reference(value, mask, attention_weight, wv, bv, wo, bo,
                     n_head=n_head, time1=time1, time2=time2)
    ref = jax.block_until_ready(ref)

    # approx=True reciprocal (EUP vrcp) in the softmax denominator -> slightly looser
    # tolerance than exact f32 division.
    np.testing.assert_allclose(np.asarray(out), np.asarray(ref), rtol=2e-3, atol=2e-3)
    print("KERNEL_OK")
</pallas_src>

<mosaic_0001>
module attributes {stable_mosaic.version = 11 : i64} {
  func.func @_linear_kernel(%arg0: i32, %arg1: memref<16x32xf32, #tpu.memory_space<vmem>>, %arg2: memref<32x128xf32, #tpu.memory_space<vmem>>, %arg3: memref<1x128xf32, #tpu.memory_space<vmem>>, %arg4: memref<16x128xf32, #tpu.memory_space<vmem>>) attributes {dimension_semantics = [#tpu.dimension_semantics<parallel>], iteration_bounds = array<i64: 1>, scalar_prefetch = 0 : i64, scratch_operands = 0 : i64, tpu.core_type = #tpu.core_type<tc>, window_params = [{transform_indices = @transform_0, window_bounds = array<i64: 16, 32>}, {pipeline_mode = #tpu.pipeline_mode<synchronous>, transform_indices = @transform_1, window_bounds = array<i64: 32, 128>}, {pipeline_mode = #tpu.pipeline_mode<synchronous>, transform_indices = @transform_2, window_bounds = array<i64: 1, 128>}, {transform_indices = @transform_3, window_bounds = array<i64: 16, 128>}]} {
    %c0 = arith.constant 0 : index
    %c0_0 = arith.constant 0 : index
    %0 = vector.load %arg1[%c0, %c0_0] : memref<16x32xf32, #tpu.memory_space<vmem>>, vector<16x32xf32>
    %c0_1 = arith.constant 0 : index
    %c0_2 = arith.constant 0 : index
    %1 = vector.load %arg2[%c0_1, %c0_2] : memref<32x128xf32, #tpu.memory_space<vmem>>, vector<32x128xf32>
    %cst = arith.constant dense<0.000000e+00> : vector<16x128xf32>
    %2 = tpu.matmul %0, %1, %cst {dimension_numbers = #tpu.dot_dimension_numbers<[1], [0], [0], [1], [0, 0, 1, 1], [], []>} : vector<16x32xf32>, vector<32x128xf32>, vector<16x128xf32> -> vector<16x128xf32>
    %c0_3 = arith.constant 0 : index
    %c0_4 = arith.constant 0 : index
    %3 = vector.load %arg3[%c0_3, %c0_4] : memref<1x128xf32, #tpu.memory_space<vmem>>, vector<1x128xf32>
    %4 = vector.broadcast %3 : vector<1x128xf32> to vector<16x128xf32>
    %5 = arith.addf %2, %4 : vector<16x128xf32>
    %c0_5 = arith.constant 0 : index
    %c0_6 = arith.constant 0 : index
    %6 = vector.load %arg4[%c0_5, %c0_6] : memref<16x128xf32, #tpu.memory_space<vmem>>, vector<16x128xf32>
    tpu.vector_store %arg4[%c0_5, %c0_6], %5 {strides = array<i32>} : memref<16x128xf32, #tpu.memory_space<vmem>>, vector<16x128xf32>,
    return
  }
  func.func @transform_0(%arg0: i32) -> (i32, i32) {
    %c0_i32 = arith.constant 0 : i32
    %c0_i32_0 = arith.constant 0 : i32
    return %arg0, %c0_i32 : i32, i32
  }
  func.func @transform_1(%arg0: i32) -> (i32, i32) {
    %c0_i32 = arith.constant 0 : i32
    %c0_i32_0 = arith.constant 0 : i32
    %c0_i32_1 = arith.constant 0 : i32
    return %c0_i32, %c0_i32_0 : i32, i32
  }
  func.func @transform_2(%arg0: i32) -> (i32, i32) {
    %c0_i32 = arith.constant 0 : i32
    %c0_i32_0 = arith.constant 0 : i32
    %c0_i32_1 = arith.constant 0 : i32
    return %c0_i32, %c0_i32_0 : i32, i32
  }
  func.func @transform_3(%arg0: i32) -> (i32, i32) {
    %c0_i32 = arith.constant 0 : i32
    %c0_i32_0 = arith.constant 0 : i32
    return %arg0, %c0_i32 : i32, i32
  }
}

</mosaic_0001>

<llo_original>
// kernel: tpu_custom_call.1
$region0: #{tpu_custom_call.1}
  #allocation0 [shape = 'u32[]', space=smem, size = 0x4, offset = 0x4, fixed_abs, tag = 'smem constant byte address 0x4 - core index']
  #allocation1 [shape = 'u32[72,128]{1,0:T(1,128)}', space=vmem, size = 0x9000, scoped, tag = 'internal scratch']
  %s0 = inlined_call_operand.hbm [shape: f32[16,32], index: 0, kind: input, shape index: {}]
  %s1 = inlined_call_operand.hbm [shape: f32[32,128], index: 1, kind: input, shape index: {}]
  %s2 = inlined_call_operand.vmem [shape: f32[1,128], index: 2, kind: input, shape index: {}]
  %s3 = inlined_call_operand.hbm [shape: f32[16,128], index: 3, kind: output, shape index: {}]
  %s4 = sld [smem:[#allocation0]]
  $region30: #{tpu_custom_call.1} parent=0
    _
  %s6 = ssub.s32 1, %s4
  %s7 = scalar_select 0, %s6, %s4
  $region1: #{tpu_custom_call.1} parent=0
    #allocation2 [shape = 'u8[8192]{0}', space=vmem, size = 0x2000, scoped, tag = 'input window, operand 0, single buffered']
    #allocation3 [shape = 's32[1]{0}', space=sflag, size = 0x4, scoped, tag = 'scoped memory for tpu_custom_call.1']
    #allocation4 [shape = 's32[1]{0}', space=sflag, size = 0x4, scoped, tag = 'scoped memory for tpu_custom_call.1']
    #allocation5 [shape = 'u8[16384]{0}', space=vmem, size = 0x4000, scoped, tag = 'input window, operand 1, single buffered']
    #allocation6 [shape = 's32[1]{0}', space=sflag, size = 0x4, scoped, tag = 'scoped memory for tpu_custom_call.1']
    #allocation7 [shape = 'u8[8192]{0}', space=vmem, size = 0x2000, scoped, tag = 'output window, operand 0, single buffered']
    %8 = vsyncpa [#allocation3], 0
    %9 = vsyncpa [#allocation6], 0
    %10 = vsyncpa [#allocation4], 0
    // Predicated region
    $region2: #{tpu_custom_call.1} parent=1 // pred_check
      _
    $region3: #{tpu_custom_call.1} parent=1 // pred_check_branch
      %12 = sbr.rel (0) target = $region5
    $region4: #{tpu_custom_call.1} parent=1 // pred_region
      %14 = vsyncadd [#allocation3], 0
      %s15 = sshll.u32 %s0, 4
      %s16 = int_to_ptr.hbm [resolvable:$true] %s15
      %s17 = sshll.u32 [#allocation2], 4
      %s18 = int_to_ptr.vmem [resolvable:$true] %s17
      %23 = dma.hbm_to_vmem [thread:$0]  %s16, 256, %s18, [#allocation3], 128, 128, 8
    $region5: #{tpu_custom_call.1} parent=1 // pred_fallthru
      _
    // Predicated region
    $region6: #{tpu_custom_call.1} parent=1 // pred_check
      _
    $region7: #{tpu_custom_call.1} parent=1 // pred_check_branch
      %25 = sbr.rel (0) target = $region9
    $region8: #{tpu_custom_call.1} parent=1 // pred_region
      %27 = vsyncadd [#allocation6], 0
      %s28 = sshll.u32 %s1, 4
      %s29 = int_to_ptr.hbm [resolvable:$true] %s28
      %s30 = sshll.u32 [#allocation5], 4
      %s31 = int_to_ptr.vmem [resolvable:$true] %s30
      %36 = dma.hbm_to_vmem [thread:$0]  %s29, 512, %s31, [#allocation6], 128, 128, 8
    $region9: #{tpu_custom_call.1} parent=1 // pred_fallthru
      _
    // Predicated region
    $region10: #{tpu_custom_call.1} parent=1 // pred_check
      _
    $region11: #{tpu_custom_call.1} parent=1 // pred_check_branch
      %38 = sbr.rel (0) target = $region13
    $region12: #{tpu_custom_call.1} parent=1 // pred_region
      _
    $region13: #{tpu_custom_call.1} parent=1 // pred_fallthru
      _
    // Predicated region
    $region14: #{tpu_custom_call.1} parent=1 // pred_check
      _
    $region15: #{tpu_custom_call.1} parent=1 // pred_check_branch
      %40 = sbr.rel (0) target = $region17
    $region16: #{tpu_custom_call.1} parent=1 // pred_region
      %42 = dma.done [#allocation3], 256
    $region17: #{tpu_custom_call.1} parent=1 // pred_fallthru
      _
    // Predicated region
    $region18: #{tpu_custom_call.1} parent=1 // pred_check
      _
    $region19: #{tpu_custom_call.1} parent=1 // pred_check_branch
      %44 = sbr.rel (0) target = $region21
    $region20: #{tpu_custom_call.1} parent=1 // pred_region
      %46 = dma.done [#allocation6], 512
    $region21: #{tpu_custom_call.1} parent=1 // pred_fallthru
      _
    %v47 = vld [vmem:[#allocation2] sm:$0xff]
    %v48 = vld [vmem:[#allocation2 + $0x8] sm:$0xff]
    %v49 = vld [vmem:[#allocation5] sm:$0xff]
    %v50 = vld [vmem:[#allocation5 + $0x8] sm:$0xff]
    %v51 = vld [vmem:[#allocation5 + $0x10] sm:$0xff]
    %v52 = vld [vmem:[#allocation5 + $0x18] sm:$0xff]
    %v53 = vld [vmem:[%s2] sm:$0x1]
    %v55 = vperm.slane %v53, 0
    %vm57 = vcmask 261120
    %v59 = vsel %vm57, %v47, 0
    %v62 = vsel %vm57, %v48, 0
    %64 = vmatpush.msra.mxu0 0.0
    %65 = vmatpush.msra.mxu0 0.0
    %66 = vmatpush.msra.mxu0 0.0
    %67 = vmatpush.msra.mxu0 0.0
    %68 = vmatpush.msra.mxu0 0.0
    %69 = vmatpush.msra.mxu0 0.0
    %70 = vmatpush.msra.mxu0 0.0
    %71 = vmatpush.msra.mxu0 0.0
    %72 = vmatpush.msra.mxu0 0.0
    %73 = vmatpush.msra.mxu0 0.0
    %74 = vmatpush.msra.mxu0 0.0
    %75 = vmatpush.msra.mxu0 0.0
    %76 = vmatpush.msra.mxu0 %v52
    %77 = vmatpush.msra.mxu0 %v51
    %78 = vmatpush.msra.mxu0 %v50
    %79 = vmatpush.msra.mxu0 %v49
    %80 = vmatmul.f32.gmra.mxu0 %v59
    %v81 = vpop.f32.mrf.mxu0
    %v82 = vadd.f32 %v55, %v81
    %83 = vmatmul.f32.gmra.mxu0 %v62
    %v84 = vpop.f32.mrf.mxu0
    %v85 = vadd.f32 %v55, %v84
    %86 = vdwg.mxu0
    %87 = vst [vmem:[#allocation7] sm:$0xff] %v82
    %88 = vst [vmem:[#allocation7 + $0x8] sm:$0xff] %v85
    // Predicated region
    $region22: #{tpu_custom_call.1} parent=1 // pred_check
      _
    $region23: #{tpu_custom_call.1} parent=1 // pred_check_branch
      %90 = sbr.rel (0) target = $region25
    $region24: #{tpu_custom_call.1} parent=1 // pred_region
      %92 = vsyncadd [#allocation4], 0
      %s93 = sshll.u32 [#allocation7], 4
      %s94 = int_to_ptr.vmem [resolvable:$true] %s93
      %s95 = sshll.u32 %s3, 4
      %s96 = int_to_ptr.hbm [resolvable:$true] %s95
      %101 = dma.vmem_to_hbm [thread:$0]  %s94, 256, %s96, [#allocation4], 128, 128, 8
    $region25: #{tpu_custom_call.1} parent=1 // pred_fallthru
      _
    // Predicated region
    $region26: #{tpu_custom_call.1} parent=1 // pred_check
      _
    $region27: #{tpu_custom_call.1} parent=1 // pred_check_branch
      %103 = sbr.rel (0) target = $region29
    $region28: #{tpu_custom_call.1} parent=1 // pred_region
      %105 = dma.done [#allocation4], 256
    $region29: #{tpu_custom_call.1} parent=1 // pred_fallthru
      _
    %106 = vsyncpa [#allocation3], 1
    %107 = vsyncpa [#allocation6], 1
    %108 = vsyncpa [#allocation4], 1

</llo_original>
